<compile_context>
chip_gen: v5e
topology: v5e:2x2
jax: 0.10.0
libtpu: 0.0.40
codegen_flags: <defaults>
</compile_context>

<pallas_src>
import functools

import jax
import jax.numpy as jnp
from jax.experimental import pallas as pl
from jax.experimental.pallas import tpu as pltpu


_LANE = 128
_SUBLANE = 8


def _round_up(x, m):
    return ((x + m - 1) // m) * m


def _device_kind():
    try:
        return jax.devices()[0].device_kind.lower()
    except Exception:
        return ""


def _default_bf16_elementwise(device_kind):
    # v6e/v7x have bf16 VALU/EUP; v5e (and older) do not, so bf16 elementwise math there
    # would only add converts.
    return ("v6" in device_kind) or ("v7" in device_kind)


def _vmem_budget_and_limit(device_kind):
    if "v7" in device_kind:
        # v7x: 64 MiB physical VMEM -> keep the pipelined working set well under it.
        return 36 << 20, 48 << 20
    if any(v in device_kind for v in ("v4", "v5", "v6")):
        # 128 MiB physical VMEM (v5e scoped default is only 16 MiB -> raise the limit).
        return 64 << 20, 100 << 20
    # Unknown chip: be conservative.
    return 32 << 20, 48 << 20


def _pad_seq(s):
    # S % 8 == 0 is required so the in-kernel (TB,S,*) <-> (TB*S,*) reshapes are free
    # leading-dim collapses; pad all the way to a lane multiple (unmasked vst on the
    # `weights` output) only when the zero padding stays modest.
    if s >= 64:
        return _round_up(s, _LANE)
    return _round_up(s, _SUBLANE)


def _pad_feat(e):
    # lane-dense `weighted` stores; below 64 the extra enc DMA / compute on zero padding
    # outweighs the unmasked-vst win.
    if e >= 64:
        return _round_up(e, _LANE)
    return e


def _per_row_vmem_bytes(S, E, H, bf16_elementwise):
    """Rough per-batch-row VMEM footprint of one grid step (double-buffered I/O + temps)."""
    et = 2 if bf16_elementwise else 4
    io = 2 * (S * E * 2      # enc (bf16), double-buffered
              + H * 2        # hidden
              + S * 4        # mask (int32)
              + E * 4        # weighted out (f32)
              + S * 4)       # weights out (f32)
    temps = (S * H * (4 + 2 * et)                             # m (f32) + tanh / V-product temps
             + S * E * (et + (0 if bf16_elementwise else 4))  # weighted product (+ f32 enc copy)
             + S * 8)                                         # scores / softmax temps
    return io + temps


def _choose_block_b(B, S, E, H, bf16_elementwise, device_kind, budget_bytes, block_b=None):
    if block_b is None:
        fixed = 2 * 2 * (E * H + H * H + 2 * H) + (2 << 20)   # resident weights + slack
        per_row = _per_row_vmem_bytes(S, E, H, bf16_elementwise)
        block_b = max(1, max(budget_bytes - fixed, per_row) // per_row)
    block_b = min(int(block_b), B)
    # v7x has 2 TensorCores: keep >= 2 grid steps when B is large enough so the "parallel"
    # batch axis actually shards across both cores.
    if "v7" in device_kind and B >= 16:
        block_b = min(block_b, max(8, ((B // 2) // 8) * 8))
    if block_b >= B:
        return B, B
    block_b = max(_SUBLANE, (block_b // _SUBLANE) * _SUBLANE)  # sublane-aligned partial blocks
    return int(block_b), int(_round_up(B, block_b))


def _attn_kernel(hidden_ref, enc_ref, mask_ref,
                 we_ref, wh_ref, bm_ref, vw_ref, vb_ref,
                 weighted_ref, weights_ref, *, bf16_elementwise):
    TB, S, E = enc_ref.shape
    H = we_ref.shape[1]

    enc = enc_ref[...]                                   # (TB, S, E) bf16
    enc_flat = enc.reshape(TB * S, E)                    # free: wrapper guarantees S % 8 == 0

    # --- MXU: one dense 2-D matmul for the encoder projection (bf16 in, f32 acc) ---
    m_enc = jnp.dot(enc_flat, we_ref[...],
                    preferred_element_type=jnp.float32)  # (TB*S, H) f32

    # --- row-constant term, computed once per tile; M-bias folded in --------------
    hid_bias = jnp.dot(hidden_ref[...], wh_ref[...],
                       preferred_element_type=jnp.float32) + bm_ref[...]   # (TB, H) f32

    m = m_enc.reshape(TB, S, H) + hid_bias[:, None, :]   # (TB, S, H) f32

    # --- V projection (output width 1): EUP tanh + VPU multiply + XLU lane reduce --
    if bf16_elementwise:
        # v6e/v7x: bf16 EUP/VALU -> ~2x transcendental throughput and half the temps;
        # the reduce still accumulates in f32.
        t = jnp.tanh(m.astype(jnp.bfloat16))                               # (TB, S, H) bf16
        vw_b = vw_ref[...].astype(jnp.bfloat16)                            # (1, H), hoisted
        scores = jnp.sum(t * vw_b[None, :, :], axis=-1,
                         dtype=jnp.float32) + vb_ref[0]                    # (TB, S) f32
    else:
        t = jnp.tanh(m)                                                    # f32 (v5e path)
        scores = jnp.sum(t * vw_ref[...][None, :, :], axis=-1) + vb_ref[0]

    # --- masked softmax over the sequence axis (always f32) ------------------------
    # NOTE: rows whose mask is all-True produce NaN weights, matching PyTorch behavior.
    scores = jnp.where(mask_ref[...] != 0, -jnp.inf, scores)
    smax = jnp.max(scores, axis=1, keepdims=True)        # (TB, 1)
    ex = jnp.exp(scores - smax)                          # (TB, S)
    denom = jnp.sum(ex, axis=1, keepdims=True)           # (TB, 1)
    w = ex / denom                                       # (TB, S)
    weights_ref[...] = w

    # --- weighted = bmm(weights, enc): VPU multiply + sublane reduce (enc resident) -
    if bf16_elementwise:
        wb = w.astype(jnp.bfloat16)
        weighted_ref[...] = jnp.sum(wb[:, :, None] * enc, axis=1, dtype=jnp.float32)
    else:
        weighted_ref[...] = jnp.sum(w[:, :, None] * enc.astype(jnp.float32), axis=1)


def _build_attn_call(B_pad, S_p, E_p, H, block_b, bf16_elementwise,
                     single_buffer_weights, vmem_limit_bytes):
    vmem = pltpu.MemorySpace.VMEM
    smem = pltpu.MemorySpace.SMEM
    # Invariant blocks (same block index every grid step): request single buffering to
    # save VMEM; caller falls back to default double buffering if unsupported.
    wkw = dict(pipeline_mode=pl.Buffered(1)) if single_buffer_weights else {}

    in_specs = [
        pl.BlockSpec((block_b, H), lambda i: (i, 0), memory_space=vmem),            # hidden
        pl.BlockSpec((block_b, S_p, E_p), lambda i: (i, 0, 0), memory_space=vmem),  # enc
        pl.BlockSpec((block_b, S_p), lambda i: (i, 0), memory_space=vmem),          # mask
        pl.BlockSpec((E_p, H), lambda i: (0, 0), memory_space=vmem, **wkw),         # W_e (resident)
        pl.BlockSpec((H, H), lambda i: (0, 0), memory_space=vmem, **wkw),           # W_h (resident)
        pl.BlockSpec((1, H), lambda i: (0, 0), memory_space=vmem, **wkw),           # b_M
        pl.BlockSpec((1, H), lambda i: (0, 0), memory_space=vmem, **wkw),           # V weight row
        pl.BlockSpec(memory_space=smem),                                            # V bias scalar
    ]
    out_specs = (
        pl.BlockSpec((block_b, E_p), lambda i: (i, 0), memory_space=vmem),          # weighted
        pl.BlockSpec((block_b, S_p), lambda i: (i, 0), memory_space=vmem),          # weights
    )
    return pl.pallas_call(
        functools.partial(_attn_kernel, bf16_elementwise=bf16_elementwise),
        grid=(B_pad // block_b,),
        in_specs=in_specs,
        out_specs=out_specs,
        out_shape=(
            jax.ShapeDtypeStruct((B_pad, E_p), jnp.float32),
            jax.ShapeDtypeStruct((B_pad, S_p), jnp.float32),
        ),
        compiler_params=pltpu.CompilerParams(
            dimension_semantics=("parallel",),
            vmem_limit_bytes=vmem_limit_bytes),
    )


def attn_forward(hidden, encoder_outputs, mask, params,
                 compute_dtype=jnp.bfloat16, block_b=None, bf16_elementwise=None):
    """hidden: (B, 1, H) or (B, H); encoder_outputs: (B, S, E); mask: (B, S) bool."""
    if hidden.ndim == 3:
        hidden = hidden[:, 0, :]
    B, S, E = encoder_outputs.shape
    H = hidden.shape[-1]
    we, wh, bm, vw, vb = params

    dk = _device_kind()
    if bf16_elementwise is None:
        bf16_elementwise = _default_bf16_elementwise(dk)
    budget, vmem_limit = _vmem_budget_and_limit(dk)

    # Layout padding: S % 8 == 0 always (free reshapes); lane-dense (128-multiple) output
    # slabs for `weights` / `weighted` when S / E are big enough to amortize the zeros.
    S_p = _pad_seq(S)
    E_p = _pad_feat(E)

    block_b, B_pad = _choose_block_b(B, S_p, E_p, H, bf16_elementwise, dk, budget, block_b)

    cdt = compute_dtype
    hidden_c = jnp.pad(hidden, ((0, B_pad - B), (0, 0))).astype(cdt)
    enc_c = jnp.pad(encoder_outputs,
                    ((0, B_pad - B), (0, S_p - S), (0, E_p - E))).astype(cdt)
    # Padded sequence positions (and padded batch rows) are masked out; padded batch rows
    # are sliced off after the call, so their all-masked NaN softmax is harmless.
    mask_p = jnp.pad(mask.astype(jnp.int32),
                     ((0, B_pad - B), (0, S_p - S)), constant_values=1)
    we_c = jnp.pad(we, ((0, E_p - E), (0, 0))).astype(cdt)
    wh_c = wh.astype(cdt)
    bm_p = bm.reshape(1, H).astype(jnp.float32)
    vw_p = vw.reshape(1, H).astype(jnp.float32)
    vb_p = vb.reshape(1).astype(jnp.float32)

    args = (hidden_c, enc_c, mask_p, we_c, wh_c, bm_p, vw_p, vb_p)
    try:
        out = _build_attn_call(B_pad, S_p, E_p, H, block_b, bf16_elementwise,
                               True, vmem_limit)(*args)
        out = jax.block_until_ready(out)
    except Exception:
        # TODO(synk): pl.Buffered(1) single-buffering of the invariant weight blocks is not
        # available on this jax version; fall back to default double buffering.
        out = _build_attn_call(B_pad, S_p, E_p, H, block_b, bf16_elementwise,
                               False, vmem_limit)(*args)
    weighted, weights = out

    # Match PyTorch return shapes: weighted (B,1,E), weights (B,1,S)
    return weighted[:B, None, :E], weights[:B, None, :S]


def init_params(key, encoder_outputs_size, hidden_size):
    """Kernel params. From a trained PyTorch module use:
       we = M.weight[:, :E].T, wh = M.weight[:, E:].T, bm = M.bias,
       vw = V.weight (shape (1, H)), vb = V.bias (shape (1,))."""
    E, H = encoder_outputs_size, hidden_size
    k1, k2, k3, k4, k5 = jax.random.split(key, 5)
    we = jax.random.normal(k1, (E, H), jnp.float32) * 0.1
    wh = jax.random.normal(k2, (H, H), jnp.float32) * 0.1
    bm = jax.random.normal(k3, (H,), jnp.float32) * 0.1
    vw = jax.random.normal(k4, (1, H), jnp.float32) * 0.1
    vb = jax.random.normal(k5, (1,), jnp.float32) * 0.1
    return we, wh, bm, vw, vb


def _reference(hidden, encoder_outputs, mask, params,
               compute_dtype=jnp.float32, bf16_elementwise=False):
    """Pure-JAX reference of the PyTorch forward. `compute_dtype` / `bf16_elementwise`
    mirror the kernel's mixed-precision path (f32 / False reproduces exact PyTorch math)."""
    we, wh, bm, vw, vb = params
    if hidden.ndim == 3:
        hidden = hidden[:, 0, :]
    cdt = compute_dtype
    enc_c = encoder_outputs.astype(cdt)
    m = (jnp.einsum('bse,eh->bsh', enc_c, we.astype(cdt),
                    preferred_element_type=jnp.float32)
         + jnp.dot(hidden.astype(cdt), wh.astype(cdt),
                   preferred_element_type=jnp.float32)[:, None, :]
         + bm[None, None, :])
    if bf16_elementwise:
        t = jnp.tanh(m.astype(jnp.bfloat16))
        scores = jnp.sum(t * vw[0].astype(jnp.bfloat16)[None, None, :],
                         axis=-1, dtype=jnp.float32) + vb[0]
    else:
        t = jnp.tanh(m)
        scores = jnp.sum(t * vw[0][None, None, :], axis=-1) + vb[0]
    scores = jnp.where(mask, -jnp.inf, scores)
    w = jax.nn.softmax(scores, axis=1)
    if bf16_elementwise:
        weighted = jnp.sum(w.astype(jnp.bfloat16)[:, :, None] * enc_c,
                           axis=1, dtype=jnp.float32)
    else:
        weighted = jnp.einsum('bs,bse->be', w, enc_c.astype(jnp.float32))
    return weighted[:, None, :], w[:, None, :]


if __name__ == "__main__":
    B, S, E, H = 2, 8, 32, 32

    key = jax.random.PRNGKey(0)
    kp, kh, ke = jax.random.split(key, 3)

    params = init_params(kp, E, H)
    hidden = jax.random.normal(kh, (B, 1, H), jnp.float32)
    encoder_outputs = jax.random.normal(ke, (B, S, E), jnp.float32)
    # Mask out the last two positions of every sequence (True => masked).
    mask = jnp.zeros((B, S), jnp.bool_).at[:, -2:].set(True)

    weighted, weights = attn_forward(hidden, encoder_outputs, mask, params)
    jax.block_until_ready((weighted, weights))

    assert weighted.shape == (B, 1, E) and weights.shape == (B, 1, S)

    # Invariant: attention weights are a softmax distribution over unmasked positions.
    assert jnp.allclose(weights.sum(-1), 1.0, atol=1e-3)

    # Check against a reference that mirrors the kernel's mixed-precision path
    # (bf16 matmul inputs; bf16 elementwise only where the kernel uses it on this chip).
    bf16_el = _default_bf16_elementwise(_device_kind())
    ref_w_mp, ref_wt_mp = _reference(hidden, encoder_outputs, mask, params,
                                     compute_dtype=jnp.bfloat16,
                                     bf16_elementwise=bf16_el)
    assert jnp.allclose(weighted, ref_w_mp, atol=2e-2, rtol=2e-2)
    assert jnp.allclose(weights, ref_wt_mp, atol=2e-2, rtol=2e-2)

    # Loose sanity check against the pure-f32 PyTorch-equivalent reference
    # (difference is only the bf16 quantization in the kernel's compute path).
    ref_w_f32, ref_wt_f32 = _reference(hidden, encoder_outputs, mask, params,
                                       compute_dtype=jnp.float32,
                                       bf16_elementwise=False)
    assert jnp.allclose(weighted, ref_w_f32, atol=5e-2, rtol=5e-2)
    assert jnp.allclose(weights, ref_wt_f32, atol=5e-2, rtol=5e-2)

    print("KERNEL_OK")
</pallas_src>

<mosaic_0001>
module attributes {stable_mosaic.version = 11 : i64} {
  func.func @_attn_kernel(%arg0: i32, %arg1: memref<2x32xbf16, #tpu.memory_space<vmem>>, %arg2: memref<2x8x32xbf16, #tpu.memory_space<vmem>>, %arg3: memref<2x8xi32, #tpu.memory_space<vmem>>, %arg4: memref<32x32xbf16, #tpu.memory_space<vmem>>, %arg5: memref<32x32xbf16, #tpu.memory_space<vmem>>, %arg6: memref<1x32xf32, #tpu.memory_space<vmem>>, %arg7: memref<1x32xf32, #tpu.memory_space<vmem>>, %arg8: memref<1xf32, #tpu.memory_space<smem>>, %arg9: memref<2x32xf32, #tpu.memory_space<vmem>>, %arg10: memref<2x8xf32, #tpu.memory_space<vmem>>) attributes {dimension_semantics = [#tpu.dimension_semantics<parallel>], iteration_bounds = array<i64: 1>, scalar_prefetch = 0 : i64, scratch_operands = 0 : i64, tpu.core_type = #tpu.core_type<tc>, window_params = [{transform_indices = @transform_0, window_bounds = array<i64: 2, 32>}, {transform_indices = @transform_1, window_bounds = array<i64: 2, 8, 32>}, {transform_indices = @transform_2, window_bounds = array<i64: 2, 8>}, {pipeline_mode = #tpu.pipeline_mode<synchronous>, transform_indices = @transform_3, window_bounds = array<i64: 32, 32>}, {pipeline_mode = #tpu.pipeline_mode<synchronous>, transform_indices = @transform_4, window_bounds = array<i64: 32, 32>}, {pipeline_mode = #tpu.pipeline_mode<synchronous>, transform_indices = @transform_5, window_bounds = array<i64: 1, 32>}, {pipeline_mode = #tpu.pipeline_mode<synchronous>, transform_indices = @transform_6, window_bounds = array<i64: 1, 32>}, {transform_indices = @transform_7, window_bounds = array<i64: 1>}, {transform_indices = @transform_8, window_bounds = array<i64: 2, 32>}, {transform_indices = @transform_9, window_bounds = array<i64: 2, 8>}]} {
    %c0 = arith.constant 0 : index
    %c0_0 = arith.constant 0 : index
    %c0_1 = arith.constant 0 : index
    %0 = vector.load %arg2[%c0, %c0_0, %c0_1] : memref<2x8x32xbf16, #tpu.memory_space<vmem>>, vector<2x8x32xbf16>
    %1 = vector.shape_cast %0 : vector<2x8x32xbf16> to vector<16x32xbf16>
    %c0_2 = arith.constant 0 : index
    %c0_3 = arith.constant 0 : index
    %2 = vector.load %arg4[%c0_2, %c0_3] : memref<32x32xbf16, #tpu.memory_space<vmem>>, vector<32x32xbf16>
    %cst = arith.constant dense<0.000000e+00> : vector<16x32xf32>
    %3 = tpu.matmul %1, %2, %cst {dimension_numbers = #tpu.dot_dimension_numbers<[1], [0], [0], [1], [0, 0, 1, 1], [], []>} : vector<16x32xbf16>, vector<32x32xbf16>, vector<16x32xf32> -> vector<16x32xf32>
    %c0_4 = arith.constant 0 : index
    %c0_5 = arith.constant 0 : index
    %4 = vector.load %arg1[%c0_4, %c0_5] : memref<2x32xbf16, #tpu.memory_space<vmem>>, vector<2x32xbf16>
    %c0_6 = arith.constant 0 : index
    %c0_7 = arith.constant 0 : index
    %5 = vector.load %arg5[%c0_6, %c0_7] : memref<32x32xbf16, #tpu.memory_space<vmem>>, vector<32x32xbf16>
    %cst_8 = arith.constant dense<0.000000e+00> : vector<2x32xf32>
    %6 = tpu.matmul %4, %5, %cst_8 {dimension_numbers = #tpu.dot_dimension_numbers<[1], [0], [0], [1], [0, 0, 1, 1], [], []>} : vector<2x32xbf16>, vector<32x32xbf16>, vector<2x32xf32> -> vector<2x32xf32>
    %c0_9 = arith.constant 0 : index
    %c0_10 = arith.constant 0 : index
    %7 = vector.load %arg6[%c0_9, %c0_10] : memref<1x32xf32, #tpu.memory_space<vmem>>, vector<1x32xf32>
    %8 = vector.broadcast %7 : vector<1x32xf32> to vector<2x32xf32>
    %9 = arith.addf %6, %8 : vector<2x32xf32>
    %10 = vector.shape_cast %3 : vector<16x32xf32> to vector<2x8x32xf32>
    %11 = vector.shape_cast %9 : vector<2x32xf32> to vector<2x1x32xf32>
    %12 = vector.broadcast %11 : vector<2x1x32xf32> to vector<2x8x32xf32>
    %13 = arith.addf %10, %12 : vector<2x8x32xf32>
    %14 = math.tanh %13 : vector<2x8x32xf32>
    %c0_11 = arith.constant 0 : index
    %c0_12 = arith.constant 0 : index
    %15 = vector.load %arg7[%c0_11, %c0_12] : memref<1x32xf32, #tpu.memory_space<vmem>>, vector<1x32xf32>
    %16 = vector.shape_cast %15 : vector<1x32xf32> to vector<1x1x32xf32>
    %17 = vector.broadcast %16 : vector<1x1x32xf32> to vector<2x8x32xf32>
    %18 = arith.mulf %14, %17 : vector<2x8x32xf32>
    %cst_13 = arith.constant dense<0.000000e+00> : vector<2x8xf32>
    %19 = vector.multi_reduction <add>, %18, %cst_13 [2] : vector<2x8x32xf32> to vector<2x8xf32>
    %c0_14 = arith.constant 0 : index
    %20 = memref.load %arg8[%c0_14] : memref<1xf32, #tpu.memory_space<smem>>
    %21 = vector.broadcast %20 : f32 to vector<2x8xf32>
    %22 = arith.addf %19, %21 : vector<2x8xf32>
    %c0_15 = arith.constant 0 : index
    %c0_16 = arith.constant 0 : index
    %23 = vector.load %arg3[%c0_15, %c0_16] : memref<2x8xi32, #tpu.memory_space<vmem>>, vector<2x8xi32>
    %c0_i32 = arith.constant 0 : i32
    %24 = vector.broadcast %c0_i32 : i32 to vector<2x8xi32>
    %25 = arith.cmpi ne, %23, %24 : vector<2x8xi32>
    %cst_17 = arith.constant 0xFF800000 : f32
    %26 = vector.broadcast %cst_17 : f32 to vector<2x8xf32>
    %27 = arith.select %25, %26, %22 : vector<2x8xi1>, vector<2x8xf32>
    %cst_18 = arith.constant dense<0xFF800000> : vector<2xf32>
    %28 = vector.multi_reduction <maximumf>, %27, %cst_18 [1] : vector<2x8xf32> to vector<2xf32>
    %29 = vector.shape_cast %28 : vector<2xf32> to vector<2x1xf32>
    %30 = vector.broadcast %29 : vector<2x1xf32> to vector<2x8xf32>
    %31 = arith.subf %27, %30 : vector<2x8xf32>
    %32 = math.exp %31 : vector<2x8xf32>
    %cst_19 = arith.constant dense<0.000000e+00> : vector<2xf32>
    %33 = vector.multi_reduction <add>, %32, %cst_19 [1] : vector<2x8xf32> to vector<2xf32>
    %34 = vector.shape_cast %33 : vector<2xf32> to vector<2x1xf32>
    %35 = vector.broadcast %34 : vector<2x1xf32> to vector<2x8xf32>
    %36 = arith.divf %32, %35 : vector<2x8xf32>
    %c0_20 = arith.constant 0 : index
    %c0_21 = arith.constant 0 : index
    %37 = vector.load %arg10[%c0_20, %c0_21] : memref<2x8xf32, #tpu.memory_space<vmem>>, vector<2x8xf32>
    tpu.vector_store %arg10[%c0_20, %c0_21], %36 {strides = array<i32>} : memref<2x8xf32, #tpu.memory_space<vmem>>, vector<2x8xf32>,
    %38 = vector.shape_cast %36 : vector<2x8xf32> to vector<2x8x1xf32>
    %39 = arith.extf %0 : vector<2x8x32xbf16> to vector<2x8x32xf32>
    %40 = vector.broadcast %38 : vector<2x8x1xf32> to vector<2x8x32xf32>
    %41 = arith.mulf %40, %39 : vector<2x8x32xf32>
    %cst_22 = arith.constant dense<0.000000e+00> : vector<2x32xf32>
    %42 = vector.multi_reduction <add>, %41, %cst_22 [1] : vector<2x8x32xf32> to vector<2x32xf32>
    %c0_23 = arith.constant 0 : index
    %c0_24 = arith.constant 0 : index
    %43 = vector.load %arg9[%c0_23, %c0_24] : memref<2x32xf32, #tpu.memory_space<vmem>>, vector<2x32xf32>
    tpu.vector_store %arg9[%c0_23, %c0_24], %42 {strides = array<i32>} : memref<2x32xf32, #tpu.memory_space<vmem>>, vector<2x32xf32>,
    return
  }
  func.func @transform_0(%arg0: i32) -> (i32, i32) {
    %c0_i32 = arith.constant 0 : i32
    %c0_i32_0 = arith.constant 0 : i32
    return %arg0, %c0_i32 : i32, i32
  }
  func.func @transform_1(%arg0: i32) -> (i32, i32, i32) {
    %c0_i32 = arith.constant 0 : i32
    %c0_i32_0 = arith.constant 0 : i32
    %c0_i32_1 = arith.constant 0 : i32
    return %arg0, %c0_i32, %c0_i32_0 : i32, i32, i32
  }
  func.func @transform_2(%arg0: i32) -> (i32, i32) {
    %c0_i32 = arith.constant 0 : i32
    %c0_i32_0 = arith.constant 0 : i32
    return %arg0, %c0_i32 : i32, i32
  }
  func.func @transform_3(%arg0: i32) -> (i32, i32) {
    %c0_i32 = arith.constant 0 : i32
    %c0_i32_0 = arith.constant 0 : i32
    %c0_i32_1 = arith.constant 0 : i32
    return %c0_i32, %c0_i32_0 : i32, i32
  }
  func.func @transform_4(%arg0: i32) -> (i32, i32) {
    %c0_i32 = arith.constant 0 : i32
    %c0_i32_0 = arith.constant 0 : i32
    %c0_i32_1 = arith.constant 0 : i32
    return %c0_i32, %c0_i32_0 : i32, i32
  }
  func.func @transform_5(%arg0: i32) -> (i32, i32) {
    %c0_i32 = arith.constant 0 : i32
    %c0_i32_0 = arith.constant 0 : i32
    %c0_i32_1 = arith.constant 0 : i32
    return %c0_i32, %c0_i32_0 : i32, i32
  }
  func.func @transform_6(%arg0: i32) -> (i32, i32) {
    %c0_i32 = arith.constant 0 : i32
    %c0_i32_0 = arith.constant 0 : i32
    %c0_i32_1 = arith.constant 0 : i32
    return %c0_i32, %c0_i32_0 : i32, i32
  }
  func.func @transform_7(%arg0: i32) -> i32 {
    %c0_i32 = arith.constant 0 : i32
    %c0_i32_0 = arith.constant 0 : i32
    return %c0_i32 : i32
  }
  func.func @transform_8(%arg0: i32) -> (i32, i32) {
    %c0_i32 = arith.constant 0 : i32
    %c0_i32_0 = arith.constant 0 : i32
    return %arg0, %c0_i32 : i32, i32
  }
  func.func @transform_9(%arg0: i32) -> (i32, i32) {
    %c0_i32 = arith.constant 0 : i32
    %c0_i32_0 = arith.constant 0 : i32
    return %arg0, %c0_i32 : i32, i32
  }
}

module attributes {stable_mosaic.version = 11 : i64} {
  func.func @_attn_kernel(%arg0: i32, %arg1: memref<2x32xbf16, #tpu.memory_space<vmem>>, %arg2: memref<2x8x32xbf16, #tpu.memory_space<vmem>>, %arg3: memref<2x8xi32, #tpu.memory_space<vmem>>, %arg4: memref<32x32xbf16, #tpu.memory_space<vmem>>, %arg5: memref<32x32xbf16, #tpu.memory_space<vmem>>, %arg6: memref<1x32xf32, #tpu.memory_space<vmem>>, %arg7: memref<1x32xf32, #tpu.memory_space<vmem>>, %arg8: memref<1xf32, #tpu.memory_space<smem>>, %arg9: memref<2x32xf32, #tpu.memory_space<vmem>>, %arg10: memref<2x8xf32, #tpu.memory_space<vmem>>) attributes {dimension_semantics = [#tpu.dimension_semantics<parallel>], iteration_bounds = array<i64: 1>, scalar_prefetch = 0 : i64, scratch_operands = 0 : i64, tpu.core_type = #tpu.core_type<tc>, window_params = [{transform_indices = @transform_0, window_bounds = array<i64: 2, 32>}, {transform_indices = @transform_1, window_bounds = array<i64: 2, 8, 32>}, {transform_indices = @transform_2, window_bounds = array<i64: 2, 8>}, {pipeline_mode = #tpu.pipeline_mode<synchronous>, transform_indices = @transform_3, window_bounds = array<i64: 32, 32>}, {pipeline_mode = #tpu.pipeline_mode<synchronous>, transform_indices = @transform_4, window_bounds = array<i64: 32, 32>}, {pipeline_mode = #tpu.pipeline_mode<synchronous>, transform_indices = @transform_5, window_bounds = array<i64: 1, 32>}, {pipeline_mode = #tpu.pipeline_mode<synchronous>, transform_indices = @transform_6, window_bounds = array<i64: 1, 32>}, {transform_indices = @transform_7, window_bounds = array<i64: 1>}, {transform_indices = @transform_8, window_bounds = array<i64: 2, 32>}, {transform_indices = @transform_9, window_bounds = array<i64: 2, 8>}]} {
    %c0 = arith.constant 0 : index
    %c0_0 = arith.constant 0 : index
    %c0_1 = arith.constant 0 : index
    %0 = vector.load %arg2[%c0, %c0_0, %c0_1] : memref<2x8x32xbf16, #tpu.memory_space<vmem>>, vector<2x8x32xbf16>
    %1 = vector.shape_cast %0 : vector<2x8x32xbf16> to vector<16x32xbf16>
    %c0_2 = arith.constant 0 : index
    %c0_3 = arith.constant 0 : index
    %2 = vector.load %arg4[%c0_2, %c0_3] : memref<32x32xbf16, #tpu.memory_space<vmem>>, vector<32x32xbf16>
    %cst = arith.constant dense<0.000000e+00> : vector<16x32xf32>
    %3 = tpu.matmul %1, %2, %cst {dimension_numbers = #tpu.dot_dimension_numbers<[1], [0], [0], [1], [0, 0, 1, 1], [], []>} : vector<16x32xbf16>, vector<32x32xbf16>, vector<16x32xf32> -> vector<16x32xf32>
    %c0_4 = arith.constant 0 : index
    %c0_5 = arith.constant 0 : index
    %4 = vector.load %arg1[%c0_4, %c0_5] : memref<2x32xbf16, #tpu.memory_space<vmem>>, vector<2x32xbf16>
    %c0_6 = arith.constant 0 : index
    %c0_7 = arith.constant 0 : index
    %5 = vector.load %arg5[%c0_6, %c0_7] : memref<32x32xbf16, #tpu.memory_space<vmem>>, vector<32x32xbf16>
    %cst_8 = arith.constant dense<0.000000e+00> : vector<2x32xf32>
    %6 = tpu.matmul %4, %5, %cst_8 {dimension_numbers = #tpu.dot_dimension_numbers<[1], [0], [0], [1], [0, 0, 1, 1], [], []>} : vector<2x32xbf16>, vector<32x32xbf16>, vector<2x32xf32> -> vector<2x32xf32>
    %c0_9 = arith.constant 0 : index
    %c0_10 = arith.constant 0 : index
    %7 = vector.load %arg6[%c0_9, %c0_10] : memref<1x32xf32, #tpu.memory_space<vmem>>, vector<1x32xf32>
    %8 = vector.broadcast %7 : vector<1x32xf32> to vector<2x32xf32>
    %9 = arith.addf %6, %8 : vector<2x32xf32>
    %10 = vector.shape_cast %3 : vector<16x32xf32> to vector<2x8x32xf32>
    %11 = vector.shape_cast %9 : vector<2x32xf32> to vector<2x1x32xf32>
    %12 = vector.broadcast %11 : vector<2x1x32xf32> to vector<2x8x32xf32>
    %13 = arith.addf %10, %12 : vector<2x8x32xf32>
    %14 = math.tanh %13 : vector<2x8x32xf32>
    %c0_11 = arith.constant 0 : index
    %c0_12 = arith.constant 0 : index
    %15 = vector.load %arg7[%c0_11, %c0_12] : memref<1x32xf32, #tpu.memory_space<vmem>>, vector<1x32xf32>
    %16 = vector.shape_cast %15 : vector<1x32xf32> to vector<1x1x32xf32>
    %17 = vector.broadcast %16 : vector<1x1x32xf32> to vector<2x8x32xf32>
    %18 = arith.mulf %14, %17 : vector<2x8x32xf32>
    %cst_13 = arith.constant dense<0.000000e+00> : vector<2x8xf32>
    %19 = vector.multi_reduction <add>, %18, %cst_13 [2] : vector<2x8x32xf32> to vector<2x8xf32>
    %c0_14 = arith.constant 0 : index
    %20 = memref.load %arg8[%c0_14] : memref<1xf32, #tpu.memory_space<smem>>
    %21 = vector.broadcast %20 : f32 to vector<2x8xf32>
    %22 = arith.addf %19, %21 : vector<2x8xf32>
    %c0_15 = arith.constant 0 : index
    %c0_16 = arith.constant 0 : index
    %23 = vector.load %arg3[%c0_15, %c0_16] : memref<2x8xi32, #tpu.memory_space<vmem>>, vector<2x8xi32>
    %c0_i32 = arith.constant 0 : i32
    %24 = vector.broadcast %c0_i32 : i32 to vector<2x8xi32>
    %25 = arith.cmpi ne, %23, %24 : vector<2x8xi32>
    %cst_17 = arith.constant 0xFF800000 : f32
    %26 = vector.broadcast %cst_17 : f32 to vector<2x8xf32>
    %27 = arith.select %25, %26, %22 : vector<2x8xi1>, vector<2x8xf32>
    %cst_18 = arith.constant dense<0xFF800000> : vector<2xf32>
    %28 = vector.multi_reduction <maximumf>, %27, %cst_18 [1] : vector<2x8xf32> to vector<2xf32>
    %29 = vector.shape_cast %28 : vector<2xf32> to vector<2x1xf32>
    %30 = vector.broadcast %29 : vector<2x1xf32> to vector<2x8xf32>
    %31 = arith.subf %27, %30 : vector<2x8xf32>
    %32 = math.exp %31 : vector<2x8xf32>
    %cst_19 = arith.constant dense<0.000000e+00> : vector<2xf32>
    %33 = vector.multi_reduction <add>, %32, %cst_19 [1] : vector<2x8xf32> to vector<2xf32>
    %34 = vector.shape_cast %33 : vector<2xf32> to vector<2x1xf32>
    %35 = vector.broadcast %34 : vector<2x1xf32> to vector<2x8xf32>
    %36 = arith.divf %32, %35 : vector<2x8xf32>
    %c0_20 = arith.constant 0 : index
    %c0_21 = arith.constant 0 : index
    %37 = vector.load %arg10[%c0_20, %c0_21] : memref<2x8xf32, #tpu.memory_space<vmem>>, vector<2x8xf32>
    tpu.vector_store %arg10[%c0_20, %c0_21], %36 {strides = array<i32>} : memref<2x8xf32, #tpu.memory_space<vmem>>, vector<2x8xf32>,
    %38 = vector.shape_cast %36 : vector<2x8xf32> to vector<2x8x1xf32>
    %39 = arith.extf %0 : vector<2x8x32xbf16> to vector<2x8x32xf32>
    %40 = vector.broadcast %38 : vector<2x8x1xf32> to vector<2x8x32xf32>
    %41 = arith.mulf %40, %39 : vector<2x8x32xf32>
    %cst_22 = arith.constant dense<0.000000e+00> : vector<2x32xf32>
    %42 = vector.multi_reduction <add>, %41, %cst_22 [1] : vector<2x8x32xf32> to vector<2x32xf32>
    %c0_23 = arith.constant 0 : index
    %c0_24 = arith.constant 0 : index
    %43 = vector.load %arg9[%c0_23, %c0_24] : memref<2x32xf32, #tpu.memory_space<vmem>>, vector<2x32xf32>
    tpu.vector_store %arg9[%c0_23, %c0_24], %42 {strides = array<i32>} : memref<2x32xf32, #tpu.memory_space<vmem>>, vector<2x32xf32>,
    return
  }
  func.func @transform_0(%arg0: i32) -> (i32, i32) {
    %c0_i32 = arith.constant 0 : i32
    %c0_i32_0 = arith.constant 0 : i32
    return %arg0, %c0_i32 : i32, i32
  }
  func.func @transform_1(%arg0: i32) -> (i32, i32, i32) {
    %c0_i32 = arith.constant 0 : i32
    %c0_i32_0 = arith.constant 0 : i32
    %c0_i32_1 = arith.constant 0 : i32
    return %arg0, %c0_i32, %c0_i32_0 : i32, i32, i32
  }
  func.func @transform_2(%arg0: i32) -> (i32, i32) {
    %c0_i32 = arith.constant 0 : i32
    %c0_i32_0 = arith.constant 0 : i32
    return %arg0, %c0_i32 : i32, i32
  }
  func.func @transform_3(%arg0: i32) -> (i32, i32) {
    %c0_i32 = arith.constant 0 : i32
    %c0_i32_0 = arith.constant 0 : i32
    %c0_i32_1 = arith.constant 0 : i32
    return %c0_i32, %c0_i32_0 : i32, i32
  }
  func.func @transform_4(%arg0: i32) -> (i32, i32) {
    %c0_i32 = arith.constant 0 : i32
    %c0_i32_0 = arith.constant 0 : i32
    %c0_i32_1 = arith.constant 0 : i32
    return %c0_i32, %c0_i32_0 : i32, i32
  }
  func.func @transform_5(%arg0: i32) -> (i32, i32) {
    %c0_i32 = arith.constant 0 : i32
    %c0_i32_0 = arith.constant 0 : i32
    %c0_i32_1 = arith.constant 0 : i32
    return %c0_i32, %c0_i32_0 : i32, i32
  }
  func.func @transform_6(%arg0: i32) -> (i32, i32) {
    %c0_i32 = arith.constant 0 : i32
    %c0_i32_0 = arith.constant 0 : i32
    %c0_i32_1 = arith.constant 0 : i32
    return %c0_i32, %c0_i32_0 : i32, i32
  }
  func.func @transform_7(%arg0: i32) -> i32 {
    %c0_i32 = arith.constant 0 : i32
    %c0_i32_0 = arith.constant 0 : i32
    return %c0_i32 : i32
  }
  func.func @transform_8(%arg0: i32) -> (i32, i32) {
    %c0_i32 = arith.constant 0 : i32
    %c0_i32_0 = arith.constant 0 : i32
    return %arg0, %c0_i32 : i32, i32
  }
  func.func @transform_9(%arg0: i32) -> (i32, i32) {
    %c0_i32 = arith.constant 0 : i32
    %c0_i32_0 = arith.constant 0 : i32
    return %arg0, %c0_i32 : i32, i32
  }
}

</mosaic_0001>

<llo_original>
// kernel: tpu_custom_call.1
$region0: #{tpu_custom_call.1}
  #allocation0 [shape = 'u32[]', space=smem, size = 0x4, offset = 0x4, fixed_abs, tag = 'smem constant byte address 0x4 - core index']
  #allocation1 [shape = 'u32[72,128]{1,0:T(1,128)}', space=vmem, size = 0x9000, scoped, tag = 'internal scratch']
  #allocation2 [shape = 'f32[1]{0:T(128)S(6)}', space=smem, size = 0x200, scoped, tag = 'scoped memory for tpu_custom_call.1']
  %s0 = inlined_call_operand.vmem [shape: bf16[2,32], index: 0, kind: input, shape index: {}]
  %s1 = inlined_call_operand.hbm [shape: bf16[2,8,32], index: 1, kind: input, shape index: {}]
  %s2 = inlined_call_operand.vmem [shape: s32[2,8], index: 2, kind: input, shape index: {}]
  %s3 = inlined_call_operand.hbm [shape: bf16[32,32], index: 3, kind: input, shape index: {}]
  %s4 = inlined_call_operand.hbm [shape: bf16[32,32], index: 4, kind: input, shape index: {}]
  %s5 = inlined_call_operand.vmem [shape: f32[1,32], index: 5, kind: input, shape index: {}]
  %s6 = inlined_call_operand.vmem [shape: f32[1,32], index: 6, kind: input, shape index: {}]
  %s7 = inlined_call_operand.<no memory space> [shape: f32[1], index: 7, kind: input, shape index: {}]
  %s8 = inlined_call_operand.hbm [shape: f32[2,32], index: 8, kind: output, shape index: {0}]
  %s9 = inlined_call_operand.hbm [shape: f32[2,8], index: 9, kind: output, shape index: {1}]
  %10 = xla_tuple %s8, %s9
  %s11 = sld [smem:[#allocation0]]
  $region62: #{tpu_custom_call.1} parent=0
    _
  %s13 = ssub.s32 1, %s11
  %s14 = scalar_select 0, %s13, %s11
  %15 = sst [smem:[#allocation2]] %s7
  $region1: #{tpu_custom_call.1} parent=0
    #allocation3 [shape = 'u8[4096]{0}', space=vmem, size = 0x1000, scoped, tag = 'input window, operand 1, single buffered']
    #allocation4 [shape = 's32[1]{0}', space=sflag, size = 0x4, scoped, tag = 'scoped memory for tpu_custom_call.1']
    #allocation5 [shape = 's32[1]{0}', space=sflag, size = 0x4, scoped, tag = 'scoped memory for tpu_custom_call.1']
    #allocation6 [shape = 'u8[8192]{0}', space=vmem, size = 0x2000, scoped, tag = 'input window, operand 3, single buffered']
    #allocation7 [shape = 's32[1]{0}', space=sflag, size = 0x4, scoped, tag = 'scoped memory for tpu_custom_call.1']
    #allocation8 [shape = 'u8[8192]{0}', space=vmem, size = 0x2000, scoped, tag = 'input window, operand 4, single buffered']
    #allocation9 [shape = 'u8[1024]{0}', space=vmem, size = 0x400, scoped, tag = 'output window, operand 0, single buffered']
    #allocation10 [shape = 'u8[1024]{0}', space=vmem, size = 0x400, scoped, tag = 'output window, operand 1, single buffered']
    #allocation11 [shape = 's32[1]{0}', space=sflag, size = 0x4, scoped, tag = 'scoped memory for tpu_custom_call.1']
    %16 = vsyncpa [#allocation4], 0
    %17 = vsyncpa [#allocation7], 0
    %18 = vsyncpa [#allocation5], 0
    %19 = vsyncpa [#allocation11], 0
    // Predicated region
    $region2: #{tpu_custom_call.1} parent=1 // pred_check
      _
    $region3: #{tpu_custom_call.1} parent=1 // pred_check_branch
      %21 = sbr.rel (0) target = $region5
    $region4: #{tpu_custom_call.1} parent=1 // pred_region
      _
    $region5: #{tpu_custom_call.1} parent=1 // pred_fallthru
      _
    // Predicated region
    $region6: #{tpu_custom_call.1} parent=1 // pred_check
      _
    $region7: #{tpu_custom_call.1} parent=1 // pred_check_branch
      %23 = sbr.rel (0) target = $region9
    $region8: #{tpu_custom_call.1} parent=1 // pred_region
      %25 = vsyncadd [#allocation4], 0
      %s26 = sshll.u32 %s1, 4
      %s27 = int_to_ptr.hbm [resolvable:$true] %s26
      %s28 = sshll.u32 [#allocation3], 4
      %s29 = int_to_ptr.vmem [resolvable:$true] %s28
      %34 = dma.hbm_to_vmem [thread:$0]  %s27, 128, %s29, [#allocation4], 64, 64, 4
    $region9: #{tpu_custom_call.1} parent=1 // pred_fallthru
      _
    // Predicated region
    $region10: #{tpu_custom_call.1} parent=1 // pred_check
      _
    $region11: #{tpu_custom_call.1} parent=1 // pred_check_branch
      %36 = sbr.rel (0) target = $region13
    $region12: #{tpu_custom_call.1} parent=1 // pred_region
      _
    $region13: #{tpu_custom_call.1} parent=1 // pred_fallthru
      _
    // Predicated region
    $region14: #{tpu_custom_call.1} parent=1 // pred_check
      _
    $region15: #{tpu_custom_call.1} parent=1 // pred_check_branch
      %38 = sbr.rel (0) target = $region17
    $region16: #{tpu_custom_call.1} parent=1 // pred_region
      %40 = vsyncadd [#allocation7], 0
      %s41 = sshll.u32 %s3, 4
      %s42 = int_to_ptr.hbm [resolvable:$true] %s41
      %s43 = sshll.u32 [#allocation6], 4
      %s44 = int_to_ptr.vmem [resolvable:$true] %s43
      %49 = dma.hbm_to_vmem [thread:$0]  %s42, 256, %s44, [#allocation7], 64, 64, 4
    $region17: #{tpu_custom_call.1} parent=1 // pred_fallthru
      _
    // Predicated region
    $region18: #{tpu_custom_call.1} parent=1 // pred_check
      _
    $region19: #{tpu_custom_call.1} parent=1 // pred_check_branch
      %51 = sbr.rel (0) target = $region21
    $region20: #{tpu_custom_call.1} parent=1 // pred_region
      %53 = vsyncadd [#allocation7], 0
      %s54 = sshll.u32 %s4, 4
      %s55 = int_to_ptr.hbm [resolvable:$true] %s54
      %s56 = sshll.u32 [#allocation8], 4
      %s57 = int_to_ptr.vmem [resolvable:$true] %s56
      %62 = dma.hbm_to_vmem [thread:$0]  %s55, 256, %s57, [#allocation7], 64, 64, 4
    $region21: #{tpu_custom_call.1} parent=1 // pred_fallthru
      _
    // Predicated region
    $region22: #{tpu_custom_call.1} parent=1 // pred_check
      _
    $region23: #{tpu_custom_call.1} parent=1 // pred_check_branch
      %64 = sbr.rel (0) target = $region25
    $region24: #{tpu_custom_call.1} parent=1 // pred_region
      _
    $region25: #{tpu_custom_call.1} parent=1 // pred_fallthru
      _
    // Predicated region
    $region26: #{tpu_custom_call.1} parent=1 // pred_check
      _
    $region27: #{tpu_custom_call.1} parent=1 // pred_check_branch
      %66 = sbr.rel (0) target = $region29
    $region28: #{tpu_custom_call.1} parent=1 // pred_region
      _
    $region29: #{tpu_custom_call.1} parent=1 // pred_fallthru
      _
    // Predicated region
    $region30: #{tpu_custom_call.1} parent=1 // pred_check
      _
    $region31: #{tpu_custom_call.1} parent=1 // pred_check_branch
      %68 = sbr.rel (0) target = $region33
    $region32: #{tpu_custom_call.1} parent=1 // pred_region
      _
    $region33: #{tpu_custom_call.1} parent=1 // pred_fallthru
      _
    // Predicated region
    $region34: #{tpu_custom_call.1} parent=1 // pred_check
      _
    $region35: #{tpu_custom_call.1} parent=1 // pred_check_branch
      %70 = sbr.rel (0) target = $region37
    $region36: #{tpu_custom_call.1} parent=1 // pred_region
      %72 = dma.done [#allocation4], 128
    $region37: #{tpu_custom_call.1} parent=1 // pred_fallthru
      _
    // Predicated region
    $region38: #{tpu_custom_call.1} parent=1 // pred_check
      _
    $region39: #{tpu_custom_call.1} parent=1 // pred_check_branch
      %74 = sbr.rel (0) target = $region41
    $region40: #{tpu_custom_call.1} parent=1 // pred_region
      %76 = dma.done [#allocation7], 256
    $region41: #{tpu_custom_call.1} parent=1 // pred_fallthru
      _
    // Predicated region
    $region42: #{tpu_custom_call.1} parent=1 // pred_check
      _
    $region43: #{tpu_custom_call.1} parent=1 // pred_check_branch
      %78 = sbr.rel (0) target = $region45
    $region44: #{tpu_custom_call.1} parent=1 // pred_region
      %80 = dma.done [#allocation7], 256
    $region45: #{tpu_custom_call.1} parent=1 // pred_fallthru
      _
    %v82 = vld [vmem:[#allocation3] sm:$0xf]
    %v83 = vld [vmem:[#allocation3 + $0x4] sm:$0xf]
    %v84 = vld [vmem:[#allocation6] sm:$0xf]
    %v85 = vld [vmem:[#allocation6 + $0x4] sm:$0xf]
    %v86 = vld [vmem:[#allocation6 + $0x8] sm:$0xf]
    %v87 = vld [vmem:[#allocation6 + $0xc] sm:$0xf]
    %v90 = vunpack.c.l.b16 %v82
    %v91 = vunpack.c.l.b16 %v83
    %v92 = vpack.c.b16 %v91, %v90
    %v97 = vunpack.c.l.b16 %v84
    %v98 = vunpack.c.l.b16 %v85
    %v99 = vunpack.c.l.b16 %v86
    %v100 = vunpack.c.l.b16 %v87
    %v101 = vpack.c.b16 %v98, %v97
    %v102 = vpack.c.b16 %v100, %v99
    %vm105 = vcmask 261120
    %v107 = vsel %vm105, %v92, 0
    %109 = vmatpush.bf16.msra.mxu0 0
    %110 = vmatpush.bf16.msra.mxu0 0
    %111 = vmatpush.bf16.msra.mxu0 0
    %112 = vmatpush.bf16.msra.mxu0 0
    %113 = vmatpush.bf16.msra.mxu0 0
    %114 = vmatpush.bf16.msra.mxu0 0
    %115 = vmatpush.bf16.msra.mxu0 %v102
    %116 = vmatpush.bf16.msra.mxu0 %v101
    %117 = vmatmul.bf16.gmra.mxu0 %v107
    %v118 = vpop.f32.mrf.mxu0
    %v119 = vadd.f32 0.0, %v118
    %v120 = vpop.f32.mrf.mxu0
    %v121 = vadd.f32 0.0, %v120
    %122 = vdwg.mxu0
    %v123 = vld [vmem:[%s0] sm:$0x1]
    %v124 = vld [vmem:[#allocation8] sm:$0xf]
    %v125 = vld [vmem:[#allocation8 + $0x4] sm:$0xf]
    %v126 = vld [vmem:[#allocation8 + $0x8] sm:$0xf]
    %v127 = vld [vmem:[#allocation8 + $0xc] sm:$0xf]
    %v128 = vld [vmem:[%s5] sm:$0x1]
    %v130 = vperm.slane %v128, 0
    %v136 = vunpack.c.l.b16 %v124
    %v137 = vunpack.c.l.b16 %v125
    %v138 = vunpack.c.l.b16 %v126
    %v139 = vunpack.c.l.b16 %v127
    %v140 = vpack.c.b16 %v137, %v136
    %v141 = vpack.c.b16 %v139, %v138
    %v145 = vsel %vm105, %v123, 0
    %147 = vmatpush.bf16.msra.mxu0 0
    %148 = vmatpush.bf16.msra.mxu0 0
    %149 = vmatpush.bf16.msra.mxu0 0
    %150 = vmatpush.bf16.msra.mxu0 0
    %151 = vmatpush.bf16.msra.mxu0 0
    %152 = vmatpush.bf16.msra.mxu0 0
    %153 = vmatpush.bf16.msra.mxu0 %v141
    %154 = vmatpush.bf16.msra.mxu0 %v140
    %155 = vmatmul.bf16.gmra.mxu0 %v145
    %v156 = vpop.f32.mrf.mxu0
    %v157 = vadd.f32 %v130, %v156
    %v158 = vpop.f32.mrf.mxu0
    %159 = vdwg.mxu0
    %v161 = vrot.slane %v157, 1
    %v162 = vperm.slane %v157, 0
    %v163 = vperm.slane %v161, 0
    %v166 = vadd.f32 %v119, %v162
    %v167 = vadd.f32 %v121, %v163
    %v168 = vtanh.pop %v166
    %v169 = vtanh.pop %v167
    %v170 = vld [vmem:[%s6] sm:$0x1]
    %v172 = vperm.slane %v170, 0
    %v174 = vmul.f32 %v168, %v172
    %v175 = vmul.f32 %v169, %v172
    %v176 = vsel %vm105, %v174, 0.0
    %177 = vadd.xlane.f32.xlu0 %v176
    %v178 = vpop.xlane.xlu0 %177
    %v179 = vsel %vm105, %v175, 0.0
    %180 = vadd.xlane.f32.xlu0 %v179
    %v181 = vpop.xlane.xlu0 %180
    %s182 = sld [smem:[#allocation2]]
    %v183 = vstv %s182
    %v184 = vadd.f32 %v178, %v183
    %v185 = vadd.f32 %v181, %v183
    %v186 = vld [vmem:[%s2] sm:$0x3]
    %vm187 = vcmp.ne.s32.totalorder %v186, 0
    %v190 = vlaneseq
    %v191 = vand.u32 %v190, 127
    %v192 = vperm.slane %v184, %v191
    %v193 = vperm.slane %v185, %v191
    %vm194 = vcmask 1041409
    %v195 = vsel %vm194, %v193, %v192
    %v197 = vsel %vm187, -inf, %v195
    %vm198 = vcmask 58368
    %v199 = vsel %vm198, %v197, -inf
    %200 = vmax.xlane.f32.xlu0 %v199
    %v201 = vpop.xlane.xlu0 %200
    %v202 = vsub.f32 %v197, %v201
    %v203 = vmul.f32 %v202, 1.442695
    %v204 = vpow.pop %v203
    %v205 = vsel %vm198, %v204, 0.0
    %206 = vadd.xlane.f32.xlu0 %v205
    %v207 = vpop.xlane.xlu0 %206
    %v208 = vrcp.pop %v207
    %v209 = vmul.f32 %v207, %v208
    %v210 = vsub.f32 1.0, %v209
    %v211 = vmul.f32 %v208, %v210
    %v212 = vadd.f32 %v208, %v211
    %vm213 = vweird.f32 %v207
    %vm214 = vweird.f32 %v208
    %vm215 = vmor %vm213, %vm214
    %v216 = vsel %vm215, %v208, %v212
    %v217 = vand.u32 2147483647, %v207
    %vm218 = vcmp.eq.f32.partialorder %v217, 8.507059e+37
    %v219 = vand.u32 %v207, 2147483648
    %v220 = vor.u32 1.1754944e-38, %v219
    %v221 = vsel %vm218, %v220, %v216
    %v222 = vmul.f32 %v204, %v221
    %223 = vst.msk [vmem:[#allocation10] sm:$0x3] %vm198, %v222
    %v224 = vperm.slane %v222, 0
    %v225 = vlaneseq
    %v226 = vshrl.u32 %v225, 7
    %228 = vset.pattern.permute.xlu0 %v226
    %229 = vperm.xlu0 %228, %v224
    %v230 = vpop.permute.xlu0 %229
    %v231 = vperm.slane %v222, 1
    %v232 = vlaneseq
    %v233 = vshrl.u32 %v232, 7
    %235 = vset.pattern.permute.xlu0 %v233
    %236 = vperm.xlu0 %235, %v231
    %v237 = vpop.permute.xlu0 %236
    %v238 = vunpack.c.l.bf16 %v82
    %v239 = vunpack.c.l.bf16 %v83
    %v240 = vmul.f32 %v230, %v238
    %v241 = vmul.f32 %v237, %v239
    %v242 = vsel %vm105, %v240, 0.0
    %v243 = vrot.slane %v242, 4
    %v244 = vadd.f32 %v242, %v243
    %v245 = vrot.slane %v244, 2
    %v246 = vadd.f32 %v244, %v245
    %v247 = vrot.slane %v246, 1
    %v248 = vadd.f32 %v246, %v247
    %v249 = vsel %vm105, %v241, 0.0
    %v250 = vrot.slane %v249, 4
    %v251 = vadd.f32 %v249, %v250
    %v252 = vrot.slane %v251, 2
    %v253 = vadd.f32 %v251, %v252
    %v254 = vrot.slane %v253, 1
    %v255 = vadd.f32 %v253, %v254
    %v258 = vsel %vm194, %v255, %v248
    %vm260 = vcmask 254976
    %261 = vst.msk [vmem:[#allocation9] sm:$0x3] %vm260, %v258
    // Predicated region
    $region46: #{tpu_custom_call.1} parent=1 // pred_check
      _
    $region47: #{tpu_custom_call.1} parent=1 // pred_check_branch
      %263 = sbr.rel (0) target = $region49
    $region48: #{tpu_custom_call.1} parent=1 // pred_region
      %265 = vsyncadd [#allocation5], 0
      %s267 = sshll.u32 [#allocation9], 4
      %s268 = int_to_ptr.vmem [resolvable:$true] %s267
      %s269 = sshll.u32 %s8, 4
      %s270 = int_to_ptr.hbm [resolvable:$true] %s269
      %272 = dma.vmem_to_hbm [thread:$0]  %s268, 32, %s270, [#allocation5]
    $region49: #{tpu_custom_call.1} parent=1 // pred_fallthru
      _
    // Predicated region
    $region50: #{tpu_custom_call.1} parent=1 // pred_check
      _
    $region51: #{tpu_custom_call.1} parent=1 // pred_check_branch
      %274 = sbr.rel (0) target = $region53
    $region52: #{tpu_custom_call.1} parent=1 // pred_region
      %276 = vsyncadd [#allocation11], 0
      %s278 = sshll.u32 [#allocation10], 4
      %s279 = int_to_ptr.vmem [resolvable:$true] %s278
      %s280 = sshll.u32 %s9, 4
      %s281 = int_to_ptr.hbm [resolvable:$true] %s280
      %283 = dma.vmem_to_hbm [thread:$0]  %s279, 32, %s281, [#allocation11]
    $region53: #{tpu_custom_call.1} parent=1 // pred_fallthru
      _
    // Predicated region
    $region54: #{tpu_custom_call.1} parent=1 // pred_check
      _
    $region55: #{tpu_custom_call.1} parent=1 // pred_check_branch
      %285 = sbr.rel (0) target = $region57
    $region56: #{tpu_custom_call.1} parent=1 // pred_region
      %287 = dma.done [#allocation5], 32
    $region57: #{tpu_custom_call.1} parent=1 // pred_fallthru
      _
    // Predicated region
    $region58: #{tpu_custom_call.1} parent=1 // pred_check
      _
    $region59: #{tpu_custom_call.1} parent=1 // pred_check_branch
      %289 = sbr.rel (0) target = $region61
    $region60: #{tpu_custom_call.1} parent=1 // pred_region
      %291 = dma.done [#allocation11], 32
    $region61: #{tpu_custom_call.1} parent=1 // pred_fallthru
      _
    %292 = vsyncpa [#allocation4], 1
    %293 = vsyncpa [#allocation7], 1
    %294 = vsyncpa [#allocation5], 1
    %295 = vsyncpa [#allocation11], 1

// kernel: tpu_custom_call.1
$region0: #{tpu_custom_call.1}
  #allocation0 [shape = 'u32[]', space=smem, size = 0x4, offset = 0x4, fixed_abs, tag = 'smem constant byte address 0x4 - core index']
  #allocation1 [shape = 'u32[72,128]{1,0:T(1,128)}', space=vmem, size = 0x9000, scoped, tag = 'internal scratch']
  #allocation2 [shape = 'f32[1]{0:T(128)S(6)}', space=smem, size = 0x200, scoped, tag = 'scoped memory for tpu_custom_call.1']
  %s0 = inlined_call_operand.vmem [shape: bf16[2,32], index: 0, kind: input, shape index: {}]
  %s1 = inlined_call_operand.hbm [shape: bf16[2,8,32], index: 1, kind: input, shape index: {}]
  %s2 = inlined_call_operand.vmem [shape: s32[2,8], index: 2, kind: input, shape index: {}]
  %s3 = inlined_call_operand.hbm [shape: bf16[32,32], index: 3, kind: input, shape index: {}]
  %s4 = inlined_call_operand.hbm [shape: bf16[32,32], index: 4, kind: input, shape index: {}]
  %s5 = inlined_call_operand.vmem [shape: f32[1,32], index: 5, kind: input, shape index: {}]
  %s6 = inlined_call_operand.vmem [shape: f32[1,32], index: 6, kind: input, shape index: {}]
  %s7 = inlined_call_operand.<no memory space> [shape: f32[1], index: 7, kind: input, shape index: {}]
  %s8 = inlined_call_operand.hbm [shape: f32[2,32], index: 8, kind: output, shape index: {0}]
  %s9 = inlined_call_operand.hbm [shape: f32[2,8], index: 9, kind: output, shape index: {1}]
  %10 = xla_tuple %s8, %s9
  %s11 = sld [smem:[#allocation0]]
  $region62: #{tpu_custom_call.1} parent=0
    _
  %s13 = ssub.s32 1, %s11
  %s14 = scalar_select 0, %s13, %s11
  %15 = sst [smem:[#allocation2]] %s7
  $region1: #{tpu_custom_call.1} parent=0
    #allocation3 [shape = 'u8[4096]{0}', space=vmem, size = 0x1000, scoped, tag = 'input window, operand 1, single buffered']
    #allocation4 [shape = 's32[1]{0}', space=sflag, size = 0x4, scoped, tag = 'scoped memory for tpu_custom_call.1']
    #allocation5 [shape = 's32[1]{0}', space=sflag, size = 0x4, scoped, tag = 'scoped memory for tpu_custom_call.1']
    #allocation6 [shape = 'u8[8192]{0}', space=vmem, size = 0x2000, scoped, tag = 'input window, operand 3, single buffered']
    #allocation7 [shape = 's32[1]{0}', space=sflag, size = 0x4, scoped, tag = 'scoped memory for tpu_custom_call.1']
    #allocation8 [shape = 'u8[8192]{0}', space=vmem, size = 0x2000, scoped, tag = 'input window, operand 4, single buffered']
    #allocation9 [shape = 'u8[1024]{0}', space=vmem, size = 0x400, scoped, tag = 'output window, operand 0, single buffered']
    #allocation10 [shape = 'u8[1024]{0}', space=vmem, size = 0x400, scoped, tag = 'output window, operand 1, single buffered']
    #allocation11 [shape = 's32[1]{0}', space=sflag, size = 0x4, scoped, tag = 'scoped memory for tpu_custom_call.1']
    %16 = vsyncpa [#allocation4], 0
    %17 = vsyncpa [#allocation7], 0
    %18 = vsyncpa [#allocation5], 0
    %19 = vsyncpa [#allocation11], 0
    // Predicated region
    $region2: #{tpu_custom_call.1} parent=1 // pred_check
      _
    $region3: #{tpu_custom_call.1} parent=1 // pred_check_branch
      %21 = sbr.rel (0) target = $region5
    $region4: #{tpu_custom_call.1} parent=1 // pred_region
      _
    $region5: #{tpu_custom_call.1} parent=1 // pred_fallthru
      _
    // Predicated region
    $region6: #{tpu_custom_call.1} parent=1 // pred_check
      _
    $region7: #{tpu_custom_call.1} parent=1 // pred_check_branch
      %23 = sbr.rel (0) target = $region9
    $region8: #{tpu_custom_call.1} parent=1 // pred_region
      %25 = vsyncadd [#allocation4], 0
      %s26 = sshll.u32 %s1, 4
      %s27 = int_to_ptr.hbm [resolvable:$true] %s26
      %s28 = sshll.u32 [#allocation3], 4
      %s29 = int_to_ptr.vmem [resolvable:$true] %s28
      %34 = dma.hbm_to_vmem [thread:$0]  %s27, 128, %s29, [#allocation4], 64, 64, 4
    $region9: #{tpu_custom_call.1} parent=1 // pred_fallthru
      _
    // Predicated region
    $region10: #{tpu_custom_call.1} parent=1 // pred_check
      _
    $region11: #{tpu_custom_call.1} parent=1 // pred_check_branch
      %36 = sbr.rel (0) target = $region13
    $region12: #{tpu_custom_call.1} parent=1 // pred_region
      _
    $region13: #{tpu_custom_call.1} parent=1 // pred_fallthru
      _
    // Predicated region
    $region14: #{tpu_custom_call.1} parent=1 // pred_check
      _
    $region15: #{tpu_custom_call.1} parent=1 // pred_check_branch
      %38 = sbr.rel (0) target = $region17
    $region16: #{tpu_custom_call.1} parent=1 // pred_region
      %40 = vsyncadd [#allocation7], 0
      %s41 = sshll.u32 %s3, 4
      %s42 = int_to_ptr.hbm [resolvable:$true] %s41
      %s43 = sshll.u32 [#allocation6], 4
      %s44 = int_to_ptr.vmem [resolvable:$true] %s43
      %49 = dma.hbm_to_vmem [thread:$0]  %s42, 256, %s44, [#allocation7], 64, 64, 4
    $region17: #{tpu_custom_call.1} parent=1 // pred_fallthru
      _
    // Predicated region
    $region18: #{tpu_custom_call.1} parent=1 // pred_check
      _
    $region19: #{tpu_custom_call.1} parent=1 // pred_check_branch
      %51 = sbr.rel (0) target = $region21
    $region20: #{tpu_custom_call.1} parent=1 // pred_region
      %53 = vsyncadd [#allocation7], 0
      %s54 = sshll.u32 %s4, 4
      %s55 = int_to_ptr.hbm [resolvable:$true] %s54
      %s56 = sshll.u32 [#allocation8], 4
      %s57 = int_to_ptr.vmem [resolvable:$true] %s56
      %62 = dma.hbm_to_vmem [thread:$0]  %s55, 256, %s57, [#allocation7], 64, 64, 4
    $region21: #{tpu_custom_call.1} parent=1 // pred_fallthru
      _
    // Predicated region
    $region22: #{tpu_custom_call.1} parent=1 // pred_check
      _
    $region23: #{tpu_custom_call.1} parent=1 // pred_check_branch
      %64 = sbr.rel (0) target = $region25
    $region24: #{tpu_custom_call.1} parent=1 // pred_region
      _
    $region25: #{tpu_custom_call.1} parent=1 // pred_fallthru
      _
    // Predicated region
    $region26: #{tpu_custom_call.1} parent=1 // pred_check
      _
    $region27: #{tpu_custom_call.1} parent=1 // pred_check_branch
      %66 = sbr.rel (0) target = $region29
    $region28: #{tpu_custom_call.1} parent=1 // pred_region
      _
    $region29: #{tpu_custom_call.1} parent=1 // pred_fallthru
      _
    // Predicated region
    $region30: #{tpu_custom_call.1} parent=1 // pred_check
      _
    $region31: #{tpu_custom_call.1} parent=1 // pred_check_branch
      %68 = sbr.rel (0) target = $region33
    $region32: #{tpu_custom_call.1} parent=1 // pred_region
      _
    $region33: #{tpu_custom_call.1} parent=1 // pred_fallthru
      _
    // Predicated region
    $region34: #{tpu_custom_call.1} parent=1 // pred_check
      _
    $region35: #{tpu_custom_call.1} parent=1 // pred_check_branch
      %70 = sbr.rel (0) target = $region37
    $region36: #{tpu_custom_call.1} parent=1 // pred_region
      %72 = dma.done [#allocation4], 128
    $region37: #{tpu_custom_call.1} parent=1 // pred_fallthru
      _
    // Predicated region
    $region38: #{tpu_custom_call.1} parent=1 // pred_check
      _
    $region39: #{tpu_custom_call.1} parent=1 // pred_check_branch
      %74 = sbr.rel (0) target = $region41
    $region40: #{tpu_custom_call.1} parent=1 // pred_region
      %76 = dma.done [#allocation7], 256
    $region41: #{tpu_custom_call.1} parent=1 // pred_fallthru
      _
    // Predicated region
    $region42: #{tpu_custom_call.1} parent=1 // pred_check
      _
    $region43: #{tpu_custom_call.1} parent=1 // pred_check_branch
      %78 = sbr.rel (0) target = $region45
    $region44: #{tpu_custom_call.1} parent=1 // pred_region
      %80 = dma.done [#allocation7], 256
    $region45: #{tpu_custom_call.1} parent=1 // pred_fallthru
      _
    %v82 = vld [vmem:[#allocation3] sm:$0xf]
    %v83 = vld [vmem:[#allocation3 + $0x4] sm:$0xf]
    %v84 = vld [vmem:[#allocation6] sm:$0xf]
    %v85 = vld [vmem:[#allocation6 + $0x4] sm:$0xf]
    %v86 = vld [vmem:[#allocation6 + $0x8] sm:$0xf]
    %v87 = vld [vmem:[#allocation6 + $0xc] sm:$0xf]
    %v90 = vunpack.c.l.b16 %v82
    %v91 = vunpack.c.l.b16 %v83
    %v92 = vpack.c.b16 %v91, %v90
    %v97 = vunpack.c.l.b16 %v84
    %v98 = vunpack.c.l.b16 %v85
    %v99 = vunpack.c.l.b16 %v86
    %v100 = vunpack.c.l.b16 %v87
    %v101 = vpack.c.b16 %v98, %v97
    %v102 = vpack.c.b16 %v100, %v99
    %vm105 = vcmask 261120
    %v107 = vsel %vm105, %v92, 0
    %109 = vmatpush.bf16.msra.mxu0 0
    %110 = vmatpush.bf16.msra.mxu0 0
    %111 = vmatpush.bf16.msra.mxu0 0
    %112 = vmatpush.bf16.msra.mxu0 0
    %113 = vmatpush.bf16.msra.mxu0 0
    %114 = vmatpush.bf16.msra.mxu0 0
    %115 = vmatpush.bf16.msra.mxu0 %v102
    %116 = vmatpush.bf16.msra.mxu0 %v101
    %117 = vmatmul.bf16.gmra.mxu0 %v107
    %v118 = vpop.f32.mrf.mxu0
    %v119 = vadd.f32 0.0, %v118
    %v120 = vpop.f32.mrf.mxu0
    %v121 = vadd.f32 0.0, %v120
    %122 = vdwg.mxu0
    %v123 = vld [vmem:[%s0] sm:$0x1]
    %v124 = vld [vmem:[#allocation8] sm:$0xf]
    %v125 = vld [vmem:[#allocation8 + $0x4] sm:$0xf]
    %v126 = vld [vmem:[#allocation8 + $0x8] sm:$0xf]
    %v127 = vld [vmem:[#allocation8 + $0xc] sm:$0xf]
    %v128 = vld [vmem:[%s5] sm:$0x1]
    %v130 = vperm.slane %v128, 0
    %v136 = vunpack.c.l.b16 %v124
    %v137 = vunpack.c.l.b16 %v125
    %v138 = vunpack.c.l.b16 %v126
    %v139 = vunpack.c.l.b16 %v127
    %v140 = vpack.c.b16 %v137, %v136
    %v141 = vpack.c.b16 %v139, %v138
    %v145 = vsel %vm105, %v123, 0
    %147 = vmatpush.bf16.msra.mxu0 0
    %148 = vmatpush.bf16.msra.mxu0 0
    %149 = vmatpush.bf16.msra.mxu0 0
    %150 = vmatpush.bf16.msra.mxu0 0
    %151 = vmatpush.bf16.msra.mxu0 0
    %152 = vmatpush.bf16.msra.mxu0 0
    %153 = vmatpush.bf16.msra.mxu0 %v141
    %154 = vmatpush.bf16.msra.mxu0 %v140
    %155 = vmatmul.bf16.gmra.mxu0 %v145
    %v156 = vpop.f32.mrf.mxu0
    %v157 = vadd.f32 %v130, %v156
    %v158 = vpop.f32.mrf.mxu0
    %159 = vdwg.mxu0
    %v161 = vrot.slane %v157, 1
    %v162 = vperm.slane %v157, 0
    %v163 = vperm.slane %v161, 0
    %v166 = vadd.f32 %v119, %v162
    %v167 = vadd.f32 %v121, %v163
    %v168 = vtanh.pop %v166
    %v169 = vtanh.pop %v167
    %v170 = vld [vmem:[%s6] sm:$0x1]
    %v172 = vperm.slane %v170, 0
    %v174 = vmul.f32 %v168, %v172
    %v175 = vmul.f32 %v169, %v172
    %v176 = vsel %vm105, %v174, 0.0
    %177 = vadd.xlane.f32.xlu0 %v176
    %v178 = vpop.xlane.xlu0 %177
    %v179 = vsel %vm105, %v175, 0.0
    %180 = vadd.xlane.f32.xlu0 %v179
    %v181 = vpop.xlane.xlu0 %180
    %s182 = sld [smem:[#allocation2]]
    %v183 = vstv %s182
    %v184 = vadd.f32 %v178, %v183
    %v185 = vadd.f32 %v181, %v183
    %v186 = vld [vmem:[%s2] sm:$0x3]
    %vm187 = vcmp.ne.s32.totalorder %v186, 0
    %v190 = vlaneseq
    %v191 = vand.u32 %v190, 127
    %v192 = vperm.slane %v184, %v191
    %v193 = vperm.slane %v185, %v191
    %vm194 = vcmask 1041409
    %v195 = vsel %vm194, %v193, %v192
    %v197 = vsel %vm187, -inf, %v195
    %vm198 = vcmask 58368
    %v199 = vsel %vm198, %v197, -inf
    %200 = vmax.xlane.f32.xlu0 %v199
    %v201 = vpop.xlane.xlu0 %200
    %v202 = vsub.f32 %v197, %v201
    %v203 = vmul.f32 %v202, 1.442695
    %v204 = vpow.pop %v203
    %v205 = vsel %vm198, %v204, 0.0
    %206 = vadd.xlane.f32.xlu0 %v205
    %v207 = vpop.xlane.xlu0 %206
    %v208 = vrcp.pop %v207
    %v209 = vmul.f32 %v207, %v208
    %v210 = vsub.f32 1.0, %v209
    %v211 = vmul.f32 %v208, %v210
    %v212 = vadd.f32 %v208, %v211
    %vm213 = vweird.f32 %v207
    %vm214 = vweird.f32 %v208
    %vm215 = vmor %vm213, %vm214
    %v216 = vsel %vm215, %v208, %v212
    %v217 = vand.u32 2147483647, %v207
    %vm218 = vcmp.eq.f32.partialorder %v217, 8.507059e+37
    %v219 = vand.u32 %v207, 2147483648
    %v220 = vor.u32 1.1754944e-38, %v219
    %v221 = vsel %vm218, %v220, %v216
    %v222 = vmul.f32 %v204, %v221
    %223 = vst.msk [vmem:[#allocation10] sm:$0x3] %vm198, %v222
    %v224 = vperm.slane %v222, 0
    %v225 = vlaneseq
    %v226 = vshrl.u32 %v225, 7
    %228 = vset.pattern.permute.xlu0 %v226
    %229 = vperm.xlu0 %228, %v224
    %v230 = vpop.permute.xlu0 %229
    %v231 = vperm.slane %v222, 1
    %v232 = vlaneseq
    %v233 = vshrl.u32 %v232, 7
    %235 = vset.pattern.permute.xlu0 %v233
    %236 = vperm.xlu0 %235, %v231
    %v237 = vpop.permute.xlu0 %236
    %v238 = vunpack.c.l.bf16 %v82
    %v239 = vunpack.c.l.bf16 %v83
    %v240 = vmul.f32 %v230, %v238
    %v241 = vmul.f32 %v237, %v239
    %v242 = vsel %vm105, %v240, 0.0
    %v243 = vrot.slane %v242, 4
    %v244 = vadd.f32 %v242, %v243
    %v245 = vrot.slane %v244, 2
    %v246 = vadd.f32 %v244, %v245
    %v247 = vrot.slane %v246, 1
    %v248 = vadd.f32 %v246, %v247
    %v249 = vsel %vm105, %v241, 0.0
    %v250 = vrot.slane %v249, 4
    %v251 = vadd.f32 %v249, %v250
    %v252 = vrot.slane %v251, 2
    %v253 = vadd.f32 %v251, %v252
    %v254 = vrot.slane %v253, 1
    %v255 = vadd.f32 %v253, %v254
    %v258 = vsel %vm194, %v255, %v248
    %vm260 = vcmask 254976
    %261 = vst.msk [vmem:[#allocation9] sm:$0x3] %vm260, %v258
    // Predicated region
    $region46: #{tpu_custom_call.1} parent=1 // pred_check
      _
    $region47: #{tpu_custom_call.1} parent=1 // pred_check_branch
      %263 = sbr.rel (0) target = $region49
    $region48: #{tpu_custom_call.1} parent=1 // pred_region
      %265 = vsyncadd [#allocation5], 0
      %s267 = sshll.u32 [#allocation9], 4
      %s268 = int_to_ptr.vmem [resolvable:$true] %s267
      %s269 = sshll.u32 %s8, 4
      %s270 = int_to_ptr.hbm [resolvable:$true] %s269
      %272 = dma.vmem_to_hbm [thread:$0]  %s268, 32, %s270, [#allocation5]
    $region49: #{tpu_custom_call.1} parent=1 // pred_fallthru
      _
    // Predicated region
    $region50: #{tpu_custom_call.1} parent=1 // pred_check
      _
    $region51: #{tpu_custom_call.1} parent=1 // pred_check_branch
      %274 = sbr.rel (0) target = $region53
    $region52: #{tpu_custom_call.1} parent=1 // pred_region
      %276 = vsyncadd [#allocation11], 0
      %s278 = sshll.u32 [#allocation10], 4
      %s279 = int_to_ptr.vmem [resolvable:$true] %s278
      %s280 = sshll.u32 %s9, 4
      %s281 = int_to_ptr.hbm [resolvable:$true] %s280
      %283 = dma.vmem_to_hbm [thread:$0]  %s279, 32, %s281, [#allocation11]
    $region53: #{tpu_custom_call.1} parent=1 // pred_fallthru
      _
    // Predicated region
    $region54: #{tpu_custom_call.1} parent=1 // pred_check
      _
    $region55: #{tpu_custom_call.1} parent=1 // pred_check_branch
      %285 = sbr.rel (0) target = $region57
    $region56: #{tpu_custom_call.1} parent=1 // pred_region
      %287 = dma.done [#allocation5], 32
    $region57: #{tpu_custom_call.1} parent=1 // pred_fallthru
      _
    // Predicated region
    $region58: #{tpu_custom_call.1} parent=1 // pred_check
      _
    $region59: #{tpu_custom_call.1} parent=1 // pred_check_branch
      %289 = sbr.rel (0) target = $region61
    $region60: #{tpu_custom_call.1} parent=1 // pred_region
      %291 = dma.done [#allocation11], 32
    $region61: #{tpu_custom_call.1} parent=1 // pred_fallthru
      _
    %292 = vsyncpa [#allocation4], 1
    %293 = vsyncpa [#allocation7], 1
    %294 = vsyncpa [#allocation5], 1
    %295 = vsyncpa [#allocation11], 1

</llo_original>
